<compile_context>
chip_gen: v7x
topology: tpu7x:2x2x1
jax: 0.10.0
libtpu: 0.0.40
codegen_flags: <defaults>
</compile_context>

<pallas_src>
import functools

import jax
import jax.numpy as jnp
from jax.experimental import pallas as pl
from jax.experimental.pallas import tpu as pltpu


def _mlp_kernel(x_ref, w1_ref, b1_ref, w2_ref, b2_ref, w3_ref, b3_ref,
                w4_ref, b4_ref, out_ref, *, activate):
    cdt = w1_ref.dtype  # MXU operand dtype (bf16 by default, f32 optionally)
    x = x_ref[...]      # (n_features, tile_b), batch on the lane axis

    def layer(w_ref, b_ref, h, relu):
        # MXU matmul with f32 accumulation; bias-add / ReLU stay in f32 (VPU).
        y = jnp.dot(w_ref[...], h, preferred_element_type=jnp.float32) + b_ref[...]
        if relu:
            y = jnp.maximum(y, 0.0)
        return y

    h = layer(w1_ref, b1_ref, x, relu=True)                    # (n_hiddens, tile_b) f32
    h = layer(w2_ref, b2_ref, h.astype(cdt), relu=True)
    h = layer(w3_ref, b3_ref, h.astype(cdt), relu=True)
    logits = layer(w4_ref, b4_ref, h.astype(cdt), relu=False)  # (n_actions, tile_b) f32

    if activate:
        # softmax over actions (sublane axis in this layout; PyTorch F.softmax
        # defaults to the action dim for 2-D input).
        m = jnp.max(logits, axis=0, keepdims=True)
        e = jnp.exp(logits - m)
        denom = jnp.sum(e, axis=0, keepdims=True)
        out_ref[...] = (e * pl.reciprocal(denom, approx=True)).astype(out_ref.dtype)
    else:
        out_ref[...] = logits.astype(out_ref.dtype)


def discrete_network_forward(x, params, *, activate=False, tile_b=1024,
                             compute_dtype=jnp.bfloat16):
    """Pallas implementation of DiscreteNetwork.forward.

    x: (B, n_features) float32
    params: PyTorch-layout weights w1..w4 of shape (out, in) and biases b1..b4
            of shape (out, 1), float32.
    Returns (B, n_actions) float32 (logits, or softmax probs if activate).
    """
    B, n_features = x.shape
    w1, w2, w3, w4 = (params[k].astype(compute_dtype) for k in ("w1", "w2", "w3", "w4"))
    b1, b2, b3, b4 = (params[k].astype(jnp.float32) for k in ("b1", "b2", "b3", "b4"))
    n_hiddens = w1.shape[0]
    n_actions = w4.shape[0]
    assert w1.shape == (n_hiddens, n_features)

    # Lane-dense layout: batch on the last (128-lane) axis.
    x_t = x.T.astype(compute_dtype)                     # (n_features, B)

    lane = 128
    padded_b = ((B + lane - 1) // lane) * lane
    tile_b = max(lane, min((tile_b // lane) * lane, padded_b))
    padded_b = ((padded_b + tile_b - 1) // tile_b) * tile_b
    if padded_b != B:
        x_t = jnp.pad(x_t, ((0, 0), (0, padded_b - B)))
    grid = (padded_b // tile_b,)

    itemsize = jnp.dtype(compute_dtype).itemsize
    flops = 2 * padded_b * (n_features * n_hiddens
                            + 2 * n_hiddens * n_hiddens
                            + n_hiddens * n_actions)
    bytes_accessed = (x_t.size * itemsize
                      + sum(int(w.size) * itemsize for w in (w1, w2, w3, w4))
                      + sum(int(b.size) * 4 for b in (b1, b2, b3, b4))
                      + padded_b * n_actions * 4)
    cost = pl.CostEstimate(
        flops=int(flops),
        transcendentals=int(padded_b * n_actions) if activate else 0,
        bytes_accessed=int(bytes_accessed))

    # Weights/biases use a constant index_map (resident across grid steps).
    # TODO(synk): pipeline_mode=pl.Buffered(1) on these specs would halve their
    # VMEM reservation; negligible at n_hiddens=32 so kept at the default here.
    kernel = functools.partial(_mlp_kernel, activate=activate)
    out_t = pl.pallas_call(
        kernel,
        out_shape=jax.ShapeDtypeStruct((n_actions, padded_b), jnp.float32),
        grid_spec=pltpu.PrefetchScalarGridSpec(
            num_scalar_prefetch=0,
            grid=grid,
            in_specs=[
                pl.BlockSpec((n_features, tile_b), lambda i: (0, i)),
                pl.BlockSpec((n_hiddens, n_features), lambda i: (0, 0)),
                pl.BlockSpec((n_hiddens, 1), lambda i: (0, 0)),
                pl.BlockSpec((n_hiddens, n_hiddens), lambda i: (0, 0)),
                pl.BlockSpec((n_hiddens, 1), lambda i: (0, 0)),
                pl.BlockSpec((n_hiddens, n_hiddens), lambda i: (0, 0)),
                pl.BlockSpec((n_hiddens, 1), lambda i: (0, 0)),
                pl.BlockSpec((n_actions, n_hiddens), lambda i: (0, 0)),
                pl.BlockSpec((n_actions, 1), lambda i: (0, 0)),
            ],
            out_specs=pl.BlockSpec((n_actions, tile_b), lambda i: (0, i)),
        ),
        compiler_params=pltpu.CompilerParams(
            dimension_semantics=("parallel",),
            vmem_limit_bytes=32 * 1024 * 1024),
        cost_estimate=cost,
    )(x_t, w1, b1, w2, b2, w3, b3, w4, b4)

    return out_t[:, :B].T


def init_params(key, n_features, n_hiddens, n_actions):
    """nn.Linear-style init: U(-1/sqrt(fan_in), 1/sqrt(fan_in)); PyTorch (out, in) layout."""
    dims = [(n_features, n_hiddens), (n_hiddens, n_hiddens),
            (n_hiddens, n_hiddens), (n_hiddens, n_actions)]
    params = {}
    for idx, (fan_in, fan_out) in enumerate(dims, start=1):
        key, kw, kb = jax.random.split(key, 3)
        bound = 1.0 / jnp.sqrt(jnp.float32(fan_in))
        params[f"w{idx}"] = jax.random.uniform(
            kw, (fan_out, fan_in), jnp.float32, -bound, bound)
        params[f"b{idx}"] = jax.random.uniform(
            kb, (fan_out, 1), jnp.float32, -bound, bound)
    return params


def reference_forward(x, params, *, activate=False):
    h = jnp.maximum(x @ params["w1"].T + params["b1"].T, 0.0)
    h = jnp.maximum(h @ params["w2"].T + params["b2"].T, 0.0)
    h = jnp.maximum(h @ params["w3"].T + params["b3"].T, 0.0)
    logits = h @ params["w4"].T + params["b4"].T
    if activate:
        return jax.nn.softmax(logits, axis=-1)
    return logits


if __name__ == "__main__":
    key = jax.random.PRNGKey(0)
    n_features, n_hiddens, n_actions = 16, 32, 8
    batch = 256  # with tile_b=128 -> grid=(2,): pipelining + megacore sharding exercised

    kx, kp = jax.random.split(key)
    x = jax.random.normal(kx, (batch, n_features), jnp.float32)
    params = init_params(kp, n_features, n_hiddens, n_actions)

    ref_logits = reference_forward(x, params, activate=False)
    ref_probs = reference_forward(x, params, activate=True)

    # f32 compute path — tight numerical check.
    out_logits_f32 = jax.block_until_ready(discrete_network_forward(
        x, params, activate=False, tile_b=128, compute_dtype=jnp.float32))
    out_probs_f32 = jax.block_until_ready(discrete_network_forward(
        x, params, activate=True, tile_b=128, compute_dtype=jnp.float32))
    assert out_logits_f32.shape == (batch, n_actions)
    assert out_probs_f32.shape == (batch, n_actions)
    assert jnp.allclose(out_logits_f32, ref_logits, atol=1e-4, rtol=1e-4)
    assert jnp.allclose(out_probs_f32, ref_probs, atol=2e-3, rtol=2e-3)

    # bf16-operand path (default) — fast path, loose check.
    out_logits_bf16 = jax.block_until_ready(discrete_network_forward(
        x, params, activate=False, tile_b=128))
    out_probs_bf16 = jax.block_until_ready(discrete_network_forward(
        x, params, activate=True, tile_b=128))
    assert out_logits_bf16.shape == (batch, n_actions)
    assert out_probs_bf16.shape == (batch, n_actions)
    assert jnp.allclose(out_logits_bf16, ref_logits, atol=1.5e-1, rtol=1e-1)
    assert jnp.allclose(out_probs_bf16, ref_probs, atol=5e-2, rtol=5e-2)

    print("KERNEL_OK")
</pallas_src>

<mosaic_0001>
module attributes {stable_mosaic.version = 11 : i64} {
  func.func @_mlp_kernel(%arg0: i32, %arg1: memref<16x128xf32, #tpu.memory_space<vmem>>, %arg2: memref<32x16xf32, #tpu.memory_space<vmem>>, %arg3: memref<32x1xf32, #tpu.memory_space<vmem>>, %arg4: memref<32x32xf32, #tpu.memory_space<vmem>>, %arg5: memref<32x1xf32, #tpu.memory_space<vmem>>, %arg6: memref<32x32xf32, #tpu.memory_space<vmem>>, %arg7: memref<32x1xf32, #tpu.memory_space<vmem>>, %arg8: memref<8x32xf32, #tpu.memory_space<vmem>>, %arg9: memref<8x1xf32, #tpu.memory_space<vmem>>, %arg10: memref<8x128xf32, #tpu.memory_space<vmem>>) attributes {dimension_semantics = [#tpu.dimension_semantics<parallel>], iteration_bounds = array<i64: 2>, scalar_prefetch = 0 : i64, scratch_operands = 0 : i64, tpu.core_type = #tpu.core_type<tc>, window_params = [{transform_indices = @transform_0, window_bounds = array<i64: 16, 128>}, {pipeline_mode = #tpu.pipeline_mode<synchronous>, transform_indices = @transform_1, window_bounds = array<i64: 32, 16>}, {pipeline_mode = #tpu.pipeline_mode<synchronous>, transform_indices = @transform_2, window_bounds = array<i64: 32, 1>}, {pipeline_mode = #tpu.pipeline_mode<synchronous>, transform_indices = @transform_3, window_bounds = array<i64: 32, 32>}, {pipeline_mode = #tpu.pipeline_mode<synchronous>, transform_indices = @transform_4, window_bounds = array<i64: 32, 1>}, {pipeline_mode = #tpu.pipeline_mode<synchronous>, transform_indices = @transform_5, window_bounds = array<i64: 32, 32>}, {pipeline_mode = #tpu.pipeline_mode<synchronous>, transform_indices = @transform_6, window_bounds = array<i64: 32, 1>}, {pipeline_mode = #tpu.pipeline_mode<synchronous>, transform_indices = @transform_7, window_bounds = array<i64: 8, 32>}, {pipeline_mode = #tpu.pipeline_mode<synchronous>, transform_indices = @transform_8, window_bounds = array<i64: 8, 1>}, {transform_indices = @transform_9, window_bounds = array<i64: 8, 128>}]} {
    %c0 = arith.constant 0 : index
    %c0_0 = arith.constant 0 : index
    %0 = vector.load %arg1[%c0, %c0_0] : memref<16x128xf32, #tpu.memory_space<vmem>>, vector<16x128xf32>
    %c0_1 = arith.constant 0 : index
    %c0_2 = arith.constant 0 : index
    %1 = vector.load %arg2[%c0_1, %c0_2] : memref<32x16xf32, #tpu.memory_space<vmem>>, vector<32x16xf32>
    %cst = arith.constant dense<0.000000e+00> : vector<32x128xf32>
    %2 = tpu.matmul %1, %0, %cst {dimension_numbers = #tpu.dot_dimension_numbers<[1], [0], [0], [1], [0, 0, 1, 1], [], []>} : vector<32x16xf32>, vector<16x128xf32>, vector<32x128xf32> -> vector<32x128xf32>
    %c0_3 = arith.constant 0 : index
    %c0_4 = arith.constant 0 : index
    %3 = vector.load %arg3[%c0_3, %c0_4] : memref<32x1xf32, #tpu.memory_space<vmem>>, vector<32x1xf32>
    %4 = vector.broadcast %3 : vector<32x1xf32> to vector<32x128xf32>
    %5 = arith.addf %2, %4 : vector<32x128xf32>
    %cst_5 = arith.constant 0.000000e+00 : f32
    %6 = vector.broadcast %cst_5 : f32 to vector<32x128xf32>
    %7 = arith.maximumf %5, %6 : vector<32x128xf32>
    %c0_6 = arith.constant 0 : index
    %c0_7 = arith.constant 0 : index
    %8 = vector.load %arg4[%c0_6, %c0_7] : memref<32x32xf32, #tpu.memory_space<vmem>>, vector<32x32xf32>
    %cst_8 = arith.constant dense<0.000000e+00> : vector<32x128xf32>
    %9 = tpu.matmul %8, %7, %cst_8 {dimension_numbers = #tpu.dot_dimension_numbers<[1], [0], [0], [1], [0, 0, 1, 1], [], []>} : vector<32x32xf32>, vector<32x128xf32>, vector<32x128xf32> -> vector<32x128xf32>
    %c0_9 = arith.constant 0 : index
    %c0_10 = arith.constant 0 : index
    %10 = vector.load %arg5[%c0_9, %c0_10] : memref<32x1xf32, #tpu.memory_space<vmem>>, vector<32x1xf32>
    %11 = vector.broadcast %10 : vector<32x1xf32> to vector<32x128xf32>
    %12 = arith.addf %9, %11 : vector<32x128xf32>
    %cst_11 = arith.constant 0.000000e+00 : f32
    %13 = vector.broadcast %cst_11 : f32 to vector<32x128xf32>
    %14 = arith.maximumf %12, %13 : vector<32x128xf32>
    %c0_12 = arith.constant 0 : index
    %c0_13 = arith.constant 0 : index
    %15 = vector.load %arg6[%c0_12, %c0_13] : memref<32x32xf32, #tpu.memory_space<vmem>>, vector<32x32xf32>
    %cst_14 = arith.constant dense<0.000000e+00> : vector<32x128xf32>
    %16 = tpu.matmul %15, %14, %cst_14 {dimension_numbers = #tpu.dot_dimension_numbers<[1], [0], [0], [1], [0, 0, 1, 1], [], []>} : vector<32x32xf32>, vector<32x128xf32>, vector<32x128xf32> -> vector<32x128xf32>
    %c0_15 = arith.constant 0 : index
    %c0_16 = arith.constant 0 : index
    %17 = vector.load %arg7[%c0_15, %c0_16] : memref<32x1xf32, #tpu.memory_space<vmem>>, vector<32x1xf32>
    %18 = vector.broadcast %17 : vector<32x1xf32> to vector<32x128xf32>
    %19 = arith.addf %16, %18 : vector<32x128xf32>
    %cst_17 = arith.constant 0.000000e+00 : f32
    %20 = vector.broadcast %cst_17 : f32 to vector<32x128xf32>
    %21 = arith.maximumf %19, %20 : vector<32x128xf32>
    %c0_18 = arith.constant 0 : index
    %c0_19 = arith.constant 0 : index
    %22 = vector.load %arg8[%c0_18, %c0_19] : memref<8x32xf32, #tpu.memory_space<vmem>>, vector<8x32xf32>
    %cst_20 = arith.constant dense<0.000000e+00> : vector<8x128xf32>
    %23 = tpu.matmul %22, %21, %cst_20 {dimension_numbers = #tpu.dot_dimension_numbers<[1], [0], [0], [1], [0, 0, 1, 1], [], []>} : vector<8x32xf32>, vector<32x128xf32>, vector<8x128xf32> -> vector<8x128xf32>
    %c0_21 = arith.constant 0 : index
    %c0_22 = arith.constant 0 : index
    %24 = vector.load %arg9[%c0_21, %c0_22] : memref<8x1xf32, #tpu.memory_space<vmem>>, vector<8x1xf32>
    %25 = vector.broadcast %24 : vector<8x1xf32> to vector<8x128xf32>
    %26 = arith.addf %23, %25 : vector<8x128xf32>
    %c0_23 = arith.constant 0 : index
    %c0_24 = arith.constant 0 : index
    %27 = vector.load %arg10[%c0_23, %c0_24] : memref<8x128xf32, #tpu.memory_space<vmem>>, vector<8x128xf32>
    tpu.vector_store %arg10[%c0_23, %c0_24], %26 {strides = array<i32>} : memref<8x128xf32, #tpu.memory_space<vmem>>, vector<8x128xf32>,
    return
  }
  func.func @transform_0(%arg0: i32) -> (i32, i32) {
    %c0_i32 = arith.constant 0 : i32
    %c0_i32_0 = arith.constant 0 : i32
    return %c0_i32, %arg0 : i32, i32
  }
  func.func @transform_1(%arg0: i32) -> (i32, i32) {
    %c0_i32 = arith.constant 0 : i32
    %c0_i32_0 = arith.constant 0 : i32
    %c0_i32_1 = arith.constant 0 : i32
    return %c0_i32, %c0_i32_0 : i32, i32
  }
  func.func @transform_2(%arg0: i32) -> (i32, i32) {
    %c0_i32 = arith.constant 0 : i32
    %c0_i32_0 = arith.constant 0 : i32
    %c0_i32_1 = arith.constant 0 : i32
    return %c0_i32, %c0_i32_0 : i32, i32
  }
  func.func @transform_3(%arg0: i32) -> (i32, i32) {
    %c0_i32 = arith.constant 0 : i32
    %c0_i32_0 = arith.constant 0 : i32
    %c0_i32_1 = arith.constant 0 : i32
    return %c0_i32, %c0_i32_0 : i32, i32
  }
  func.func @transform_4(%arg0: i32) -> (i32, i32) {
    %c0_i32 = arith.constant 0 : i32
    %c0_i32_0 = arith.constant 0 : i32
    %c0_i32_1 = arith.constant 0 : i32
    return %c0_i32, %c0_i32_0 : i32, i32
  }
  func.func @transform_5(%arg0: i32) -> (i32, i32) {
    %c0_i32 = arith.constant 0 : i32
    %c0_i32_0 = arith.constant 0 : i32
    %c0_i32_1 = arith.constant 0 : i32
    return %c0_i32, %c0_i32_0 : i32, i32
  }
  func.func @transform_6(%arg0: i32) -> (i32, i32) {
    %c0_i32 = arith.constant 0 : i32
    %c0_i32_0 = arith.constant 0 : i32
    %c0_i32_1 = arith.constant 0 : i32
    return %c0_i32, %c0_i32_0 : i32, i32
  }
  func.func @transform_7(%arg0: i32) -> (i32, i32) {
    %c0_i32 = arith.constant 0 : i32
    %c0_i32_0 = arith.constant 0 : i32
    %c0_i32_1 = arith.constant 0 : i32
    return %c0_i32, %c0_i32_0 : i32, i32
  }
  func.func @transform_8(%arg0: i32) -> (i32, i32) {
    %c0_i32 = arith.constant 0 : i32
    %c0_i32_0 = arith.constant 0 : i32
    %c0_i32_1 = arith.constant 0 : i32
    return %c0_i32, %c0_i32_0 : i32, i32
  }
  func.func @transform_9(%arg0: i32) -> (i32, i32) {
    %c0_i32 = arith.constant 0 : i32
    %c0_i32_0 = arith.constant 0 : i32
    return %c0_i32, %arg0 : i32, i32
  }
}

</mosaic_0001>

<llo_original>
// kernel: tpu_custom_call.1
$region0: #{tpu_custom_call.1}
  #allocation0 [shape = 'u32[]', space=smem, size = 0x4, offset = 0x4, fixed_abs, tag = 'smem constant byte address 0x4 - core index']
  #allocation1 [shape = 'u32[144,128]{1,0:T(1,128)}', space=vmem, size = 0x12000, scoped, tag = 'internal scratch']
  %s0 = inlined_call_operand.vmem [shape: f32[16,256], index: 0, kind: input, shape index: {}]
  %s1 = inlined_call_operand.vmem [shape: f32[32,16], index: 1, kind: input, shape index: {}]
  %s2 = inlined_call_operand.vmem [shape: f32[32,1], index: 2, kind: input, shape index: {}]
  %s3 = inlined_call_operand.vmem [shape: f32[32,32], index: 3, kind: input, shape index: {}]
  %s4 = inlined_call_operand.vmem [shape: f32[32,1], index: 4, kind: input, shape index: {}]
  %s5 = inlined_call_operand.vmem [shape: f32[32,32], index: 5, kind: input, shape index: {}]
  %s6 = inlined_call_operand.vmem [shape: f32[32,1], index: 6, kind: input, shape index: {}]
  %s7 = inlined_call_operand.vmem [shape: f32[8,32], index: 7, kind: input, shape index: {}]
  %s8 = inlined_call_operand.vmem [shape: f32[8,1], index: 8, kind: input, shape index: {}]
  %s9 = inlined_call_operand.hbm [shape: f32[8,256], index: 9, kind: output, shape index: {}]
  %s10 = sld [smem:[#allocation0]]
  $region107: #{tpu_custom_call.1} parent=0
    _
  %s12 = ssub.s32 1, %s10
  %s13 = scalar_select 0, %s12, %s10
  $region1: #{tpu_custom_call.1} parent=0
    #allocation2 [shape = 'u8[16384]{0}', space=vmem, size = 0x4000, scoped, tag = 'input window, operand 0']
    #allocation3 [shape = 'u8[8192]{0}', space=vmem, size = 0x2000, scoped, tag = 'output window, operand 0']
    #allocation4 [shape = 's32[2]{0}', space=sflag, size = 0x8, scoped, tag = 'scoped memory for tpu_custom_call.1']
    %14 = vsyncpa [#allocation4], 0
    %s15 = scalar_lea.sflag [#allocation4], 1
    %16 = vsyncpa %s15, 0
    loop: start=0, step=1, limit=4
    $region2: #{tpu_custom_call.1} parent=1 // loop_pre_header
      _
    $region3: #{tpu_custom_call.1} parent=1 // loop_header
      %s18 = sphi 0, %s22
      %p19 = scmp.ge.s32.totalorder %s18, 4
      %s28 = sphi 0, %s30
      %s31 = sphi 0, %s28
      %s32 = sphi 0, %s31
      %s48 = sphi 0, %s32
      %s52 = sphi 0, %s52
      %s54 = sphi 0, %s52
      %s55 = sphi 0, %s54
      %s69 = sphi 0, %s55
      %s73 = sphi 0, %s73
      %s75 = sphi 0, %s73
      %s76 = sphi 0, %s75
      %s90 = sphi 0, %s76
      %s94 = sphi 0, %s94
      %s96 = sphi 0, %s94
      %s97 = sphi 0, %s96
      %s111 = sphi 0, %s97
      %s115 = sphi 0, %s115
      %s117 = sphi 0, %s115
      %s118 = sphi 0, %s117
      %s132 = sphi 0, %s118
      %s136 = sphi 0, %s136
      %s138 = sphi 0, %s136
      %s139 = sphi 0, %s138
      %s153 = sphi 0, %s139
      %s157 = sphi 0, %s157
      %s159 = sphi 0, %s157
      %s160 = sphi 0, %s159
      %s174 = sphi 0, %s160
      %s178 = sphi 0, %s178
      %s180 = sphi 0, %s178
      %s181 = sphi 0, %s180
      %s195 = sphi 0, %s181
      %s199 = sphi 0, %s199
      %s201 = sphi 0, %s199
      %s202 = sphi 0, %s201
      %s216 = sphi 0, %s202
      %s222 = sphi 0, %s224
      %s225 = sphi 0, %s222
      %s226 = sphi 0, %s225
      %s242 = sphi 0, %s226
    $region4: #{tpu_custom_call.1} parent=1 // loop_header_branch
      %21 = sbr.rel (%p19) target = $region8
    $region5: #{tpu_custom_call.1} parent=1 // loop_body
      %s23 = ssub.s32 %s18, 1
      %s24 = ssub.s32 %s18, 2
      %s25 = sadd.s32 %s18, 1
      %s26 = ssub.s32 %s18, %s25
      %p27 = scmp.eq.s32.totalorder %s26, 0
      %s29 = sadd.s32 %s28, 1
      %s30 = scalar_select %p27, %s28, %s29
      %p33 = pneg %p27
      %p34 = scmp.eq.s32.totalorder %s18, 1
      %p35 = por %p33, %p34
      %p36 = scmp.ne.s32.totalorder %s28, %s31
      %p37 = scmp.eq.s32.totalorder %s18, 0
      %p38 = por %p36, %p37
      %p39 = scmp.ne.s32.totalorder %s28, %s31
      %p40 = scmp.eq.s32.totalorder %s23, 1
      %p41 = por %p39, %p40
      %p42 = scmp.ne.s32.totalorder %s31, %s32
      %p43 = scmp.eq.s32.totalorder %s23, 0
      %p44 = por %p42, %p43
      %p45 = scmp.ne.s32.totalorder %s31, %s32
      %p46 = scmp.eq.s32.totalorder %s24, 1
      %p47 = por %p45, %p46
      %p49 = scmp.ne.s32.totalorder %s32, %s48
      %p50 = scmp.eq.s32.totalorder %s24, 0
      %p51 = por %p49, %p50
      %s53 = sadd.s32 %s52, 1
      %p56 = scmp.eq.s32.totalorder %s18, 1
      %p57 = scmp.ne.s32.totalorder %s52, %s54
      %p58 = scmp.eq.s32.totalorder %s18, 0
      %p59 = por %p57, %p58
      %p60 = scmp.ne.s32.totalorder %s52, %s54
      %p61 = scmp.eq.s32.totalorder %s23, 1
      %p62 = por %p60, %p61
      %p63 = scmp.ne.s32.totalorder %s54, %s55
      %p64 = scmp.eq.s32.totalorder %s23, 0
      %p65 = por %p63, %p64
      %p66 = scmp.ne.s32.totalorder %s54, %s55
      %p67 = scmp.eq.s32.totalorder %s24, 1
      %p68 = por %p66, %p67
      %p70 = scmp.ne.s32.totalorder %s55, %s69
      %p71 = scmp.eq.s32.totalorder %s24, 0
      %p72 = por %p70, %p71
      %s74 = sadd.s32 %s73, 1
      %p77 = scmp.eq.s32.totalorder %s18, 1
      %p78 = scmp.ne.s32.totalorder %s73, %s75
      %p79 = scmp.eq.s32.totalorder %s18, 0
      %p80 = por %p78, %p79
      %p81 = scmp.ne.s32.totalorder %s73, %s75
      %p82 = scmp.eq.s32.totalorder %s23, 1
      %p83 = por %p81, %p82
      %p84 = scmp.ne.s32.totalorder %s75, %s76
      %p85 = scmp.eq.s32.totalorder %s23, 0
      %p86 = por %p84, %p85
      %p87 = scmp.ne.s32.totalorder %s75, %s76
      %p88 = scmp.eq.s32.totalorder %s24, 1
      %p89 = por %p87, %p88
      %p91 = scmp.ne.s32.totalorder %s76, %s90
      %p92 = scmp.eq.s32.totalorder %s24, 0
      %p93 = por %p91, %p92
      %s95 = sadd.s32 %s94, 1
      %p98 = scmp.eq.s32.totalorder %s18, 1
      %p99 = scmp.ne.s32.totalorder %s94, %s96
      %p100 = scmp.eq.s32.totalorder %s18, 0
      %p101 = por %p99, %p100
      %p102 = scmp.ne.s32.totalorder %s94, %s96
      %p103 = scmp.eq.s32.totalorder %s23, 1
      %p104 = por %p102, %p103
      %p105 = scmp.ne.s32.totalorder %s96, %s97
      %p106 = scmp.eq.s32.totalorder %s23, 0
      %p107 = por %p105, %p106
      %p108 = scmp.ne.s32.totalorder %s96, %s97
      %p109 = scmp.eq.s32.totalorder %s24, 1
      %p110 = por %p108, %p109
      %p112 = scmp.ne.s32.totalorder %s97, %s111
      %p113 = scmp.eq.s32.totalorder %s24, 0
      %p114 = por %p112, %p113
      %s116 = sadd.s32 %s115, 1
      %p119 = scmp.eq.s32.totalorder %s18, 1
      %p120 = scmp.ne.s32.totalorder %s115, %s117
      %p121 = scmp.eq.s32.totalorder %s18, 0
      %p122 = por %p120, %p121
      %p123 = scmp.ne.s32.totalorder %s115, %s117
      %p124 = scmp.eq.s32.totalorder %s23, 1
      %p125 = por %p123, %p124
      %p126 = scmp.ne.s32.totalorder %s117, %s118
      %p127 = scmp.eq.s32.totalorder %s23, 0
      %p128 = por %p126, %p127
      %p129 = scmp.ne.s32.totalorder %s117, %s118
      %p130 = scmp.eq.s32.totalorder %s24, 1
      %p131 = por %p129, %p130
      %p133 = scmp.ne.s32.totalorder %s118, %s132
      %p134 = scmp.eq.s32.totalorder %s24, 0
      %p135 = por %p133, %p134
      %s137 = sadd.s32 %s136, 1
      %p140 = scmp.eq.s32.totalorder %s18, 1
      %p141 = scmp.ne.s32.totalorder %s136, %s138
      %p142 = scmp.eq.s32.totalorder %s18, 0
      %p143 = por %p141, %p142
      %p144 = scmp.ne.s32.totalorder %s136, %s138
      %p145 = scmp.eq.s32.totalorder %s23, 1
      %p146 = por %p144, %p145
      %p147 = scmp.ne.s32.totalorder %s138, %s139
      %p148 = scmp.eq.s32.totalorder %s23, 0
      %p149 = por %p147, %p148
      %p150 = scmp.ne.s32.totalorder %s138, %s139
      %p151 = scmp.eq.s32.totalorder %s24, 1
      %p152 = por %p150, %p151
      %p154 = scmp.ne.s32.totalorder %s139, %s153
      %p155 = scmp.eq.s32.totalorder %s24, 0
      %p156 = por %p154, %p155
      %s158 = sadd.s32 %s157, 1
      %p161 = scmp.eq.s32.totalorder %s18, 1
      %p162 = scmp.ne.s32.totalorder %s157, %s159
      %p163 = scmp.eq.s32.totalorder %s18, 0
      %p164 = por %p162, %p163
      %p165 = scmp.ne.s32.totalorder %s157, %s159
      %p166 = scmp.eq.s32.totalorder %s23, 1
      %p167 = por %p165, %p166
      %p168 = scmp.ne.s32.totalorder %s159, %s160
      %p169 = scmp.eq.s32.totalorder %s23, 0
      %p170 = por %p168, %p169
      %p171 = scmp.ne.s32.totalorder %s159, %s160
      %p172 = scmp.eq.s32.totalorder %s24, 1
      %p173 = por %p171, %p172
      %p175 = scmp.ne.s32.totalorder %s160, %s174
      %p176 = scmp.eq.s32.totalorder %s24, 0
      %p177 = por %p175, %p176
      %s179 = sadd.s32 %s178, 1
      %p182 = scmp.eq.s32.totalorder %s18, 1
      %p183 = scmp.ne.s32.totalorder %s178, %s180
      %p184 = scmp.eq.s32.totalorder %s18, 0
      %p185 = por %p183, %p184
      %p186 = scmp.ne.s32.totalorder %s178, %s180
      %p187 = scmp.eq.s32.totalorder %s23, 1
      %p188 = por %p186, %p187
      %p189 = scmp.ne.s32.totalorder %s180, %s181
      %p190 = scmp.eq.s32.totalorder %s23, 0
      %p191 = por %p189, %p190
      %p192 = scmp.ne.s32.totalorder %s180, %s181
      %p193 = scmp.eq.s32.totalorder %s24, 1
      %p194 = por %p192, %p193
      %p196 = scmp.ne.s32.totalorder %s181, %s195
      %p197 = scmp.eq.s32.totalorder %s24, 0
      %p198 = por %p196, %p197
      %s200 = sadd.s32 %s199, 1
      %p203 = scmp.eq.s32.totalorder %s18, 1
      %p204 = scmp.ne.s32.totalorder %s199, %s201
      %p205 = scmp.eq.s32.totalorder %s18, 0
      %p206 = por %p204, %p205
      %p207 = scmp.ne.s32.totalorder %s199, %s201
      %p208 = scmp.eq.s32.totalorder %s23, 1
      %p209 = por %p207, %p208
      %p210 = scmp.ne.s32.totalorder %s201, %s202
      %p211 = scmp.eq.s32.totalorder %s23, 0
      %p212 = por %p210, %p211
      %p213 = scmp.ne.s32.totalorder %s201, %s202
      %p214 = scmp.eq.s32.totalorder %s24, 1
      %p215 = por %p213, %p214
      %p217 = scmp.ne.s32.totalorder %s202, %s216
      %p218 = scmp.eq.s32.totalorder %s24, 0
      %p219 = por %p217, %p218
      %s220 = ssub.s32 %s18, %s25
      %p221 = scmp.eq.s32.totalorder %s220, 0
      %s223 = sadd.s32 %s222, 1
      %s224 = scalar_select %p221, %s222, %s223
      %p227 = pneg %p221
      %p228 = scmp.eq.s32.totalorder %s18, 1
      %p229 = por %p227, %p228
      %p230 = scmp.ne.s32.totalorder %s222, %s225
      %p231 = scmp.eq.s32.totalorder %s18, 0
      %p232 = por %p230, %p231
      %p233 = scmp.ne.s32.totalorder %s222, %s225
      %p234 = scmp.eq.s32.totalorder %s23, 1
      %p235 = por %p233, %p234
      %p236 = scmp.ne.s32.totalorder %s225, %s226
      %p237 = scmp.eq.s32.totalorder %s23, 0
      %p238 = por %p236, %p237
      %p239 = scmp.ne.s32.totalorder %s225, %s226
      %p240 = scmp.eq.s32.totalorder %s24, 1
      %p241 = por %p239, %p240
      %p243 = scmp.ne.s32.totalorder %s226, %s242
      %p244 = scmp.eq.s32.totalorder %s24, 0
      %p245 = por %p243, %p244
      %p246 = scmp.le.s32.totalorder 1, %s18
      %p247 = scmp.lt.s32.totalorder %s18, 3
      %p248 = pnand %p246, %p247
      %p249 = pneg %p248
      // Predicated region
      $region9: #{tpu_custom_call.1} parent=5 // pred_check
        _
      $region10: #{tpu_custom_call.1} parent=5 // pred_check_branch
        %251 = sbr.rel (%p248) target = $region12
      $region11: #{tpu_custom_call.1} parent=5 // pred_region
        %s252 = ssub.s32 %s18, 1
        // Predicated region
        $region13: #{tpu_custom_call.1} parent=11 // pred_check
          %p253 = pneg %p65
        $region14: #{tpu_custom_call.1} parent=11 // pred_check_branch
          %255 = sbr.rel (%p253) target = $region16
        $region15: #{tpu_custom_call.1} parent=11 // pred_region
          _
        $region16: #{tpu_custom_call.1} parent=11 // pred_fallthru
          _
        // Predicated region
        $region17: #{tpu_custom_call.1} parent=11 // pred_check
          %p256 = pneg %p86
        $region18: #{tpu_custom_call.1} parent=11 // pred_check_branch
          %258 = sbr.rel (%p256) target = $region20
        $region19: #{tpu_custom_call.1} parent=11 // pred_region
          _
        $region20: #{tpu_custom_call.1} parent=11 // pred_fallthru
          _
        // Predicated region
        $region21: #{tpu_custom_call.1} parent=11 // pred_check
          %p259 = pneg %p107
        $region22: #{tpu_custom_call.1} parent=11 // pred_check_branch
          %261 = sbr.rel (%p259) target = $region24
        $region23: #{tpu_custom_call.1} parent=11 // pred_region
          _
        $region24: #{tpu_custom_call.1} parent=11 // pred_fallthru
          _
        // Predicated region
        $region25: #{tpu_custom_call.1} parent=11 // pred_check
          %p262 = pneg %p128
        $region26: #{tpu_custom_call.1} parent=11 // pred_check_branch
          %264 = sbr.rel (%p262) target = $region28
        $region27: #{tpu_custom_call.1} parent=11 // pred_region
          _
        $region28: #{tpu_custom_call.1} parent=11 // pred_fallthru
          _
        // Predicated region
        $region29: #{tpu_custom_call.1} parent=11 // pred_check
          %p265 = pneg %p149
        $region30: #{tpu_custom_call.1} parent=11 // pred_check_branch
          %267 = sbr.rel (%p265) target = $region32
        $region31: #{tpu_custom_call.1} parent=11 // pred_region
          _
        $region32: #{tpu_custom_call.1} parent=11 // pred_fallthru
          _
        // Predicated region
        $region33: #{tpu_custom_call.1} parent=11 // pred_check
          %p268 = pneg %p170
        $region34: #{tpu_custom_call.1} parent=11 // pred_check_branch
          %270 = sbr.rel (%p268) target = $region36
        $region35: #{tpu_custom_call.1} parent=11 // pred_region
          _
        $region36: #{tpu_custom_call.1} parent=11 // pred_fallthru
          _
        // Predicated region
        $region37: #{tpu_custom_call.1} parent=11 // pred_check
          %p271 = pneg %p191
        $region38: #{tpu_custom_call.1} parent=11 // pred_check_branch
          %273 = sbr.rel (%p271) target = $region40
        $region39: #{tpu_custom_call.1} parent=11 // pred_region
          _
        $region40: #{tpu_custom_call.1} parent=11 // pred_fallthru
          _
        // Predicated region
        $region41: #{tpu_custom_call.1} parent=11 // pred_check
          %p274 = pneg %p212
        $region42: #{tpu_custom_call.1} parent=11 // pred_check_branch
          %276 = sbr.rel (%p274) target = $region44
        $region43: #{tpu_custom_call.1} parent=11 // pred_region
          _
        $region44: #{tpu_custom_call.1} parent=11 // pred_fallthru
          _
      $region12: #{tpu_custom_call.1} parent=5 // pred_fallthru
        _
      %p277 = scmp.lt.s32.totalorder %s18, 2
      // Predicated region
      $region45: #{tpu_custom_call.1} parent=5 // pred_check
        %p278 = pneg %p277
      $region46: #{tpu_custom_call.1} parent=5 // pred_check_branch
        %280 = sbr.rel (%p278) target = $region48
      $region47: #{tpu_custom_call.1} parent=5 // pred_region
        // Predicated region
        $region49: #{tpu_custom_call.1} parent=47 // pred_check
          %p281 = pneg %p38
        $region50: #{tpu_custom_call.1} parent=47 // pred_check_branch
          %283 = sbr.rel (%p281) target = $region52
        $region51: #{tpu_custom_call.1} parent=47 // pred_region
          %s284 = sand.u32 %s28, 1
          %s285 = sand.u32 %s28, 1
          %s286 = smul.addr %s285, 16
          %s287 = scalar_lea.vmem [#allocation2], %s286
          %s288 = smul.addr %s18, 8
          %s289 = scalar_lea.vmem %s0, %s288
          // Predicated region
          $region53: #{tpu_custom_call.1} parent=51 // pred_check
            _
          $region54: #{tpu_custom_call.1} parent=51 // pred_check_branch
            %291 = sbr.rel (0) target = $region56
          $region55: #{tpu_custom_call.1} parent=51 // pred_region
            // Predicated region
            $region57: #{tpu_custom_call.1} parent=55 // pred_check
              _
            $region58: #{tpu_custom_call.1} parent=55 // pred_check_branch
              %293 = sbr.rel (0) target = $region60
            $region59: #{tpu_custom_call.1} parent=55 // pred_region
              // Predicated region
              $region72: #{tpu_custom_call.1} parent=59 // pred_check
                _
              $region73: #{tpu_custom_call.1} parent=59 // pred_check_branch
                %310 = sbr.rel (0) target = $region75
              $region74: #{tpu_custom_call.1} parent=59 // pred_region
                loop: start=0, step=1, limit=1
                $region76: #{tpu_custom_call.1} parent=74 // loop_pre_header
                  _
                $region77: #{tpu_custom_call.1} parent=74 // loop_header
                  %s312 = sphi 0, %s316
                  %p313 = scmp.ge.s32.totalorder %s312, 1
                  %s317 = sphi %s289, %s289
                  %s318 = sphi %s287, %s287
                $region78: #{tpu_custom_call.1} parent=74 // loop_header_branch
                  %315 = sbr.rel (%p313) target = $region82
                $region79: #{tpu_custom_call.1} parent=74 // loop_body
                  %v319 = vld [vmem:[%s317] sm:$0xff]
                  %320 = vst [vmem:[%s318] sm:$0xff] %v319
                  %v321 = vld [vmem:[%s317 + $0x10] sm:$0xff]
                  %322 = vst [vmem:[%s318 + $0x8] sm:$0xff] %v321
                $region80: #{tpu_custom_call.1} parent=74 // loop_footer
                  %s316 = sadd.s32 1, %s312
                $region81: #{tpu_custom_call.1} parent=74 // loop_footer_branch
                  %311 = sbr.rel target = $region77
                $region82: #{tpu_custom_call.1} parent=74 // loop_exit
                  _
              $region75: #{tpu_custom_call.1} parent=59 // pred_fallthru
                _
              // Predicated region
              $region83: #{tpu_custom_call.1} parent=59 // pred_check
                _
              $region84: #{tpu_custom_call.1} parent=59 // pred_check_branch
                %324 = sbr.rel target = $region86
              $region85: #{tpu_custom_call.1} parent=59 // pred_region
                _
              $region86: #{tpu_custom_call.1} parent=59 // pred_fallthru
                _
            $region60: #{tpu_custom_call.1} parent=55 // pred_fallthru
              _
            // Predicated region
            $region61: #{tpu_custom_call.1} parent=55 // pred_check
              _
            $region62: #{tpu_custom_call.1} parent=55 // pred_check_branch
              %295 = sbr.rel target = $region64
            $region63: #{tpu_custom_call.1} parent=55 // pred_region
              loop: start=0, step=1, limit=1
              $region65: #{tpu_custom_call.1} parent=63 // loop_pre_header
                _
              $region66: #{tpu_custom_call.1} parent=63 // loop_header
                %s298 = sphi 0, %s302
                %p299 = scmp.ge.s32.totalorder %s298, 1
                %s303 = sphi %s289, %s289
                %s304 = sphi %s287, %s287
              $region67: #{tpu_custom_call.1} parent=63 // loop_header_branch
                %301 = sbr.rel (%p299) target = $region71
              $region68: #{tpu_custom_call.1} parent=63 // loop_body
                %v305 = vld [vmem:[%s303] sm:$0xff]
                %306 = vst [vmem:[%s304] sm:$0xff] %v305
                %v307 = vld [vmem:[%s303 + $0x10] sm:$0xff]
                %308 = vst [vmem:[%s304 + $0x8] sm:$0xff] %v307
              $region69: #{tpu_custom_call.1} parent=63 // loop_footer
                %s302 = sadd.s32 1, %s298
              $region70: #{tpu_custom_call.1} parent=63 // loop_footer_branch
                %297 = sbr.rel target = $region66
              $region71: #{tpu_custom_call.1} parent=63 // loop_exit
                _
            $region64: #{tpu_custom_call.1} parent=55 // pred_fallthru
              _
          $region56: #{tpu_custom_call.1} parent=51 // pred_fallthru
            _
          %325 = vnop
        $region52: #{tpu_custom_call.1} parent=47 // pred_fallthru
          _
      $region48: #{tpu_custom_call.1} parent=5 // pred_fallthru
        _
      %p326 = scmp.le.s32.totalorder 1, %s18
      %p327 = scmp.lt.s32.totalorder %s18, 3
      %p328 = pnand %p326, %p327
      %p329 = pneg %p328
      // Predicated region
      $region87: #{tpu_custom_call.1} parent=5 // pred_check
        _
      $region88: #{tpu_custom_call.1} parent=5 // pred_check_branch
        %331 = sbr.rel (%p328) target = $region90
      $region89: #{tpu_custom_call.1} parent=5 // pred_region
        %s332 = ssub.s32 %s18, 1
        %s333 = sand.u32 %s31, 1
        %s334 = sand.u32 %s31, 1
        %s335 = smul.addr %s334, 16
        %s336 = scalar_lea.vmem [#allocation2], %s335
        // Predicated region
        $region91: #{tpu_custom_call.1} parent=89 // pred_check
          %p337 = pneg %p44
        $region92: #{tpu_custom_call.1} parent=89 // pred_check_branch
          %339 = sbr.rel (%p337) target = $region94
        $region93: #{tpu_custom_call.1} parent=89 // pred_region
          _
        $region94: #{tpu_custom_call.1} parent=89 // pred_fallthru
          _
        %s340 = sand.u32 %s31, 1
        %s341 = sand.u32 %s31, 1
        %s342 = smul.addr %s341, 16
        %s343 = scalar_lea.vmem [#allocation2], %s342
        %p344 = pneg %p44
        %p345 = pneg %p41
        %p346 = pneg %p65
        %p347 = pneg %p62
        %p348 = pneg %p86
        %p349 = pneg %p83
        %p350 = pneg %p107
        %p351 = pneg %p104
        %p352 = pneg %p128
        %p353 = pneg %p125
        %p354 = pneg %p149
        %p355 = pneg %p146
        %p356 = pneg %p170
        %p357 = pneg %p167
        %p358 = pneg %p191
        %p359 = pneg %p188
        %p360 = pneg %p212
        %p361 = pneg %p209
        %p362 = pneg %p238
        %p363 = pneg %p235
        %s364 = sand.u32 %s225, 1
        %s365 = scalar_lea.sflag [#allocation4], %s364
        %s366 = sand.u32 %s225, 1
        %s367 = smul.addr %s366, 8
        %s368 = scalar_lea.vmem [#allocation3], %s367
        %v369 = vld [vmem:[%s336] sm:$0xff]
        %v370 = vld [vmem:[%s336 + $0x8] sm:$0xff]
        %v371 = vld [vmem:[%s1] sm:$0xff]
        %v372 = vld [vmem:[%s1 + $0x8] sm:$0xff]
        %v373 = vld [vmem:[%s1 + $0x10] sm:$0xff]
        %v374 = vld [vmem:[%s1 + $0x18] sm:$0xff]
        %v375 = vld [vmem:[%s2] sm:$0xff]
        %v376 = vld [vmem:[%s2 + $0x8] sm:$0xff]
        %v377 = vld [vmem:[%s2 + $0x10] sm:$0xff]
        %v378 = vld [vmem:[%s2 + $0x18] sm:$0xff]
        %380 = vset.pattern.permute.xlu0 0
        %381 = vperm.xlu0 %380, %v375
        %v382 = vpop.permute.xlu0 %381
        %385 = vset.pattern.permute.xlu0 0
        %386 = vperm.xlu0 %385, %v376
        %v387 = vpop.permute.xlu0 %386
        %390 = vset.pattern.permute.xlu0 0
        %391 = vperm.xlu0 %390, %v377
        %v392 = vpop.permute.xlu0 %391
        %395 = vset.pattern.permute.xlu0 0
        %396 = vperm.xlu0 %395, %v378
        %v397 = vpop.permute.xlu0 %396
        %vm399 = vcmask 130048
        %v401 = vsel %vm399, %v371, 0
        %v404 = vsel %vm399, %v372, 0
        %v407 = vsel %vm399, %v373, 0
        %v410 = vsel %vm399, %v374, 0
        %412 = vmatprep.subr.mxu0 0.0
        %413 = vmatpush1.msra.mxu0 %v369
        %414 = vmatprep.subr.mxu0 0.0
        %415 = vmatpush1.msra.mxu0 %v370
        %416 = vmatprep.subr.mxu0 0.0
        %417 = vmatpush1.msra.mxu0 0.0
        %418 = vmatprep.subr.mxu0 0.0
        %419 = vmatpush1.msra.mxu0 0.0
        %420 = vmatprep.subr.mxu0 0.0
        %421 = vmatpush1.msra.mxu0 0.0
        %422 = vmatprep.subr.mxu0 0.0
        %423 = vmatpush1.msra.mxu0 0.0
        %424 = vmatprep.subr.mxu0 0.0
        %425 = vmatpush1.msra.mxu0 0.0
        %426 = vmatprep.subr.mxu0 0.0
        %427 = vmatpush1.msra.mxu0 0.0
        %428 = vmatprep.subr.mxu0 0.0
        %429 = vmatpush1.msra.mxu0 0.0
        %430 = vmatprep.subr.mxu0 0.0
        %431 = vmatpush1.msra.mxu0 0.0
        %432 = vmatprep.subr.mxu0 0.0
        %433 = vmatpush1.msra.mxu0 0.0
        %434 = vmatprep.subr.mxu0 0.0
        %435 = vmatpush1.msra.mxu0 0.0
        %436 = vmatprep.subr.mxu0 0.0
        %437 = vmatpush1.msra.mxu0 0.0
        %438 = vmatprep.subr.mxu0 0.0
        %439 = vmatpush1.msra.mxu0 0.0
        %440 = vmatprep.subr.mxu0 0.0
        %441 = vmatpush1.msra.mxu0 0.0
        %442 = vmatprep.subr.mxu0 0.0
        %443 = vmatpush1.msra.mxu0 0.0
        %444 = vmatprep.subr.mxu0 0.0
        %445 = vmatpush1.msra.mxu0 0.0
        %446 = vmatprep.subr.mxu0 0.0
        %447 = vmatpush1.msra.mxu0 0.0
        %448 = vmatprep.subr.mxu0 0.0
        %449 = vmatpush1.msra.mxu0 0.0
        %450 = vmatprep.subr.mxu0 0.0
        %451 = vmatpush1.msra.mxu0 0.0
        %452 = vmatprep.subr.mxu0 0.0
        %453 = vmatpush1.msra.mxu0 0.0
        %454 = vmatprep.subr.mxu0 0.0
        %455 = vmatpush1.msra.mxu0 0.0
        %456 = vmatprep.subr.mxu0 0.0
        %457 = vmatpush1.msra.mxu0 0.0
        %458 = vmatprep.subr.mxu0 0.0
        %459 = vmatpush1.msra.mxu0 0.0
        %460 = vmatprep.subr.mxu0 0.0
        %461 = vmatpush1.msra.mxu0 0.0
        %462 = vmatprep.subr.mxu0 0.0
        %463 = vmatpush1.msra.mxu0 0.0
        %464 = vmatprep.subr.mxu0 0.0
        %465 = vmatpush1.msra.mxu0 0.0
        %466 = vmatprep.subr.mxu0 0.0
        %467 = vmatpush1.msra.mxu0 0.0
        %468 = vmatprep.subr.mxu0 0.0
        %469 = vmatpush1.msra.mxu0 0.0
        %470 = vmatprep.subr.mxu0 0.0
        %471 = vmatpush1.msra.mxu0 0.0
        %472 = vmatprep.subr.mxu0 0.0
        %473 = vmatpush1.msra.mxu0 0.0
        %474 = vmatprep.subr.mxu0 0.0
        %475 = vmatpush1.msra.mxu0 0.0
        %476 = vmatprep.mubr.f32.mxu0 0.0
        %477 = vmatmul.mubr.f32.gmra.mrb[0].mxu0 %v401
        %v478 = vpop.f32.mrb[0].mxu0
        %v479 = vadd.f32 %v382, %v478
        %v480 = vpop.f32.mrb[0].mxu0
        %481 = vmatprep.mubr.f32.mxu0 0.0
        %482 = vmatmul.mubr.f32.gmra.mrb[0].mxu0 %v404
        %v483 = vpop.f32.mrb[0].mxu0
        %v484 = vadd.f32 %v387, %v483
        %v485 = vpop.f32.mrb[0].mxu0
        %486 = vmatprep.mubr.f32.mxu0 0.0
        %487 = vmatmul.mubr.f32.gmra.mrb[0].mxu0 %v407
        %v488 = vpop.f32.mrb[0].mxu0
        %v489 = vadd.f32 %v392, %v488
        %v490 = vpop.f32.mrb[0].mxu0
        %491 = vmatprep.mubr.f32.mxu0 0.0
        %492 = vmatmul.mubr.f32.gmra.mrb[0].mxu0 %v410
        %v493 = vpop.f32.mrb[0].mxu0
        %v494 = vadd.f32 %v397, %v493
        %v495 = vpop.f32.mrb[0].mxu0
        %496 = vdwg.mxu0
        %v497 = vmax.f32 %v479, 0.0
        %v498 = vmax.f32 %v484, 0.0
        %v499 = vmax.f32 %v489, 0.0
        %v500 = vmax.f32 %v494, 0.0
        %v501 = vld [vmem:[%s3] sm:$0xff]
        %v502 = vld [vmem:[%s3 + $0x8] sm:$0xff]
        %v503 = vld [vmem:[%s3 + $0x10] sm:$0xff]
        %v504 = vld [vmem:[%s3 + $0x18] sm:$0xff]
        %v505 = vld [vmem:[%s4] sm:$0xff]
        %v506 = vld [vmem:[%s4 + $0x8] sm:$0xff]
        %v507 = vld [vmem:[%s4 + $0x10] sm:$0xff]
        %v508 = vld [vmem:[%s4 + $0x18] sm:$0xff]
        %510 = vset.pattern.permute.xlu0 0
        %511 = vperm.xlu0 %510, %v505
        %v512 = vpop.permute.xlu0 %511
        %515 = vset.pattern.permute.xlu0 0
        %516 = vperm.xlu0 %515, %v506
        %v517 = vpop.permute.xlu0 %516
        %520 = vset.pattern.permute.xlu0 0
        %521 = vperm.xlu0 %520, %v507
        %v522 = vpop.permute.xlu0 %521
        %525 = vset.pattern.permute.xlu0 0
        %526 = vperm.xlu0 %525, %v508
        %v527 = vpop.permute.xlu0 %526
        %vm529 = vcmask 261120
        %v531 = vsel %vm529, %v501, 0
        %v534 = vsel %vm529, %v502, 0
        %v537 = vsel %vm529, %v503, 0
        %v540 = vsel %vm529, %v504, 0
        %542 = vmatprep.subr.mxu0 0.0
        %543 = vmatpush1.msra.mxu0 %v497
        %544 = vmatprep.subr.mxu0 0.0
        %545 = vmatpush1.msra.mxu0 %v498
        %546 = vmatprep.subr.mxu0 0.0
        %547 = vmatpush1.msra.mxu0 %v499
        %548 = vmatprep.subr.mxu0 0.0
        %549 = vmatpush1.msra.mxu0 %v500
        %550 = vmatprep.subr.mxu0 0.0
        %551 = vmatpush1.msra.mxu0 0.0
        %552 = vmatprep.subr.mxu0 0.0
        %553 = vmatpush1.msra.mxu0 0.0
        %554 = vmatprep.subr.mxu0 0.0
        %555 = vmatpush1.msra.mxu0 0.0
        %556 = vmatprep.subr.mxu0 0.0
        %557 = vmatpush1.msra.mxu0 0.0
        %558 = vmatprep.subr.mxu0 0.0
        %559 = vmatpush1.msra.mxu0 0.0
        %560 = vmatprep.subr.mxu0 0.0
        %561 = vmatpush1.msra.mxu0 0.0
        %562 = vmatprep.subr.mxu0 0.0
        %563 = vmatpush1.msra.mxu0 0.0
        %564 = vmatprep.subr.mxu0 0.0
        %565 = vmatpush1.msra.mxu0 0.0
        %566 = vmatprep.subr.mxu0 0.0
        %567 = vmatpush1.msra.mxu0 0.0
        %568 = vmatprep.subr.mxu0 0.0
        %569 = vmatpush1.msra.mxu0 0.0
        %570 = vmatprep.subr.mxu0 0.0
        %571 = vmatpush1.msra.mxu0 0.0
        %572 = vmatprep.subr.mxu0 0.0
        %573 = vmatpush1.msra.mxu0 0.0
        %574 = vmatprep.subr.mxu0 0.0
        %575 = vmatpush1.msra.mxu0 0.0
        %576 = vmatprep.subr.mxu0 0.0
        %577 = vmatpush1.msra.mxu0 0.0
        %578 = vmatprep.subr.mxu0 0.0
        %579 = vmatpush1.msra.mxu0 0.0
        %580 = vmatprep.subr.mxu0 0.0
        %581 = vmatpush1.msra.mxu0 0.0
        %582 = vmatprep.subr.mxu0 0.0
        %583 = vmatpush1.msra.mxu0 0.0
        %584 = vmatprep.subr.mxu0 0.0
        %585 = vmatpush1.msra.mxu0 0.0
        %586 = vmatprep.subr.mxu0 0.0
        %587 = vmatpush1.msra.mxu0 0.0
        %588 = vmatprep.subr.mxu0 0.0
        %589 = vmatpush1.msra.mxu0 0.0
        %590 = vmatprep.subr.mxu0 0.0
        %591 = vmatpush1.msra.mxu0 0.0
        %592 = vmatprep.subr.mxu0 0.0
        %593 = vmatpush1.msra.mxu0 0.0
        %594 = vmatprep.subr.mxu0 0.0
        %595 = vmatpush1.msra.mxu0 0.0
        %596 = vmatprep.subr.mxu0 0.0
        %597 = vmatpush1.msra.mxu0 0.0
        %598 = vmatprep.subr.mxu0 0.0
        %599 = vmatpush1.msra.mxu0 0.0
        %600 = vmatprep.subr.mxu0 0.0
        %601 = vmatpush1.msra.mxu0 0.0
        %602 = vmatprep.subr.mxu0 0.0
        %603 = vmatpush1.msra.mxu0 0.0
        %604 = vmatprep.subr.mxu0 0.0
        %605 = vmatpush1.msra.mxu0 0.0
        %606 = vmatprep.mubr.f32.mxu0 0.0
        %607 = vmatmul.mubr.f32.gmra.mrb[0].mxu0 %v531
        %v608 = vpop.f32.mrb[0].mxu0
        %v609 = vadd.f32 %v512, %v608
        %v610 = vpop.f32.mrb[0].mxu0
        %611 = vmatprep.mubr.f32.mxu0 0.0
        %612 = vmatmul.mubr.f32.gmra.mrb[0].mxu0 %v534
        %v613 = vpop.f32.mrb[0].mxu0
        %v614 = vadd.f32 %v517, %v613
        %v615 = vpop.f32.mrb[0].mxu0
        %616 = vmatprep.mubr.f32.mxu0 0.0
        %617 = vmatmul.mubr.f32.gmra.mrb[0].mxu0 %v537
        %v618 = vpop.f32.mrb[0].mxu0
        %v619 = vadd.f32 %v522, %v618
        %v620 = vpop.f32.mrb[0].mxu0
        %621 = vmatprep.mubr.f32.mxu0 0.0
        %622 = vmatmul.mubr.f32.gmra.mrb[0].mxu0 %v540
        %v623 = vpop.f32.mrb[0].mxu0
        %v624 = vadd.f32 %v527, %v623
        %v625 = vpop.f32.mrb[0].mxu0
        %626 = vdwg.mxu0
        %v627 = vmax.f32 %v609, 0.0
        %v628 = vmax.f32 %v614, 0.0
        %v629 = vmax.f32 %v619, 0.0
        %v630 = vmax.f32 %v624, 0.0
        %v631 = vld [vmem:[%s5] sm:$0xff]
        %v632 = vld [vmem:[%s5 + $0x8] sm:$0xff]
        %v633 = vld [vmem:[%s5 + $0x10] sm:$0xff]
        %v634 = vld [vmem:[%s5 + $0x18] sm:$0xff]
        %v635 = vld [vmem:[%s6] sm:$0xff]
        %v636 = vld [vmem:[%s6 + $0x8] sm:$0xff]
        %v637 = vld [vmem:[%s6 + $0x10] sm:$0xff]
        %v638 = vld [vmem:[%s6 + $0x18] sm:$0xff]
        %640 = vset.pattern.permute.xlu0 0
        %641 = vperm.xlu0 %640, %v635
        %v642 = vpop.permute.xlu0 %641
        %645 = vset.pattern.permute.xlu0 0
        %646 = vperm.xlu0 %645, %v636
        %v647 = vpop.permute.xlu0 %646
        %650 = vset.pattern.permute.xlu0 0
        %651 = vperm.xlu0 %650, %v637
        %v652 = vpop.permute.xlu0 %651
        %655 = vset.pattern.permute.xlu0 0
        %656 = vperm.xlu0 %655, %v638
        %v657 = vpop.permute.xlu0 %656
        %v660 = vsel %vm529, %v631, 0
        %v663 = vsel %vm529, %v632, 0
        %v666 = vsel %vm529, %v633, 0
        %v669 = vsel %vm529, %v634, 0
        %671 = vmatprep.subr.mxu0 0.0
        %672 = vmatpush1.msra.mxu0 %v627
        %673 = vmatprep.subr.mxu0 0.0
        %674 = vmatpush1.msra.mxu0 %v628
        %675 = vmatprep.subr.mxu0 0.0
        %676 = vmatpush1.msra.mxu0 %v629
        %677 = vmatprep.subr.mxu0 0.0
        %678 = vmatpush1.msra.mxu0 %v630
        %679 = vmatprep.subr.mxu0 0.0
        %680 = vmatpush1.msra.mxu0 0.0
        %681 = vmatprep.subr.mxu0 0.0
        %682 = vmatpush1.msra.mxu0 0.0
        %683 = vmatprep.subr.mxu0 0.0
        %684 = vmatpush1.msra.mxu0 0.0
        %685 = vmatprep.subr.mxu0 0.0
        %686 = vmatpush1.msra.mxu0 0.0
        %687 = vmatprep.subr.mxu0 0.0
        %688 = vmatpush1.msra.mxu0 0.0
        %689 = vmatprep.subr.mxu0 0.0
        %690 = vmatpush1.msra.mxu0 0.0
        %691 = vmatprep.subr.mxu0 0.0
        %692 = vmatpush1.msra.mxu0 0.0
        %693 = vmatprep.subr.mxu0 0.0
        %694 = vmatpush1.msra.mxu0 0.0
        %695 = vmatprep.subr.mxu0 0.0
        %696 = vmatpush1.msra.mxu0 0.0
        %697 = vmatprep.subr.mxu0 0.0
        %698 = vmatpush1.msra.mxu0 0.0
        %699 = vmatprep.subr.mxu0 0.0
        %700 = vmatpush1.msra.mxu0 0.0
        %701 = vmatprep.subr.mxu0 0.0
        %702 = vmatpush1.msra.mxu0 0.0
        %703 = vmatprep.subr.mxu0 0.0
        %704 = vmatpush1.msra.mxu0 0.0
        %705 = vmatprep.subr.mxu0 0.0
        %706 = vmatpush1.msra.mxu0 0.0
        %707 = vmatprep.subr.mxu0 0.0
        %708 = vmatpush1.msra.mxu0 0.0
        %709 = vmatprep.subr.mxu0 0.0
        %710 = vmatpush1.msra.mxu0 0.0
        %711 = vmatprep.subr.mxu0 0.0
        %712 = vmatpush1.msra.mxu0 0.0
        %713 = vmatprep.subr.mxu0 0.0
        %714 = vmatpush1.msra.mxu0 0.0
        %715 = vmatprep.subr.mxu0 0.0
        %716 = vmatpush1.msra.mxu0 0.0
        %717 = vmatprep.subr.mxu0 0.0
        %718 = vmatpush1.msra.mxu0 0.0
        %719 = vmatprep.subr.mxu0 0.0
        %720 = vmatpush1.msra.mxu0 0.0
        %721 = vmatprep.subr.mxu0 0.0
        %722 = vmatpush1.msra.mxu0 0.0
        %723 = vmatprep.subr.mxu0 0.0
        %724 = vmatpush1.msra.mxu0 0.0
        %725 = vmatprep.subr.mxu0 0.0
        %726 = vmatpush1.msra.mxu0 0.0
        %727 = vmatprep.subr.mxu0 0.0
        %728 = vmatpush1.msra.mxu0 0.0
        %729 = vmatprep.subr.mxu0 0.0
        %730 = vmatpush1.msra.mxu0 0.0
        %731 = vmatprep.subr.mxu0 0.0
        %732 = vmatpush1.msra.mxu0 0.0
        %733 = vmatprep.subr.mxu0 0.0
        %734 = vmatpush1.msra.mxu0 0.0
        %735 = vmatprep.mubr.f32.mxu0 0.0
        %736 = vmatmul.mubr.f32.gmra.mrb[0].mxu0 %v660
        %v737 = vpop.f32.mrb[0].mxu0
        %v738 = vadd.f32 %v642, %v737
        %v739 = vpop.f32.mrb[0].mxu0
        %740 = vmatprep.mubr.f32.mxu0 0.0
        %741 = vmatmul.mubr.f32.gmra.mrb[0].mxu0 %v663
        %v742 = vpop.f32.mrb[0].mxu0
        %v743 = vadd.f32 %v647, %v742
        %v744 = vpop.f32.mrb[0].mxu0
        %745 = vmatprep.mubr.f32.mxu0 0.0
        %746 = vmatmul.mubr.f32.gmra.mrb[0].mxu0 %v666
        %v747 = vpop.f32.mrb[0].mxu0
        %v748 = vadd.f32 %v652, %v747
        %v749 = vpop.f32.mrb[0].mxu0
        %750 = vmatprep.mubr.f32.mxu0 0.0
        %751 = vmatmul.mubr.f32.gmra.mrb[0].mxu0 %v669
        %v752 = vpop.f32.mrb[0].mxu0
        %v753 = vadd.f32 %v657, %v752
        %v754 = vpop.f32.mrb[0].mxu0
        %755 = vdwg.mxu0
        %v756 = vmax.f32 %v738, 0.0
        %v757 = vmax.f32 %v743, 0.0
        %v758 = vmax.f32 %v748, 0.0
        %v759 = vmax.f32 %v753, 0.0
        %v760 = vld [vmem:[%s7] sm:$0xff]
        %v761 = vld [vmem:[%s8] sm:$0xff]
        %763 = vset.pattern.permute.xlu0 0
        %764 = vperm.xlu0 %763, %v761
        %v765 = vpop.permute.xlu0 %764
        %v768 = vsel %vm529, %v760, 0
        %770 = vmatprep.subr.mxu0 0.0
        %771 = vmatpush1.msra.mxu0 %v756
        %772 = vmatprep.subr.mxu0 0.0
        %773 = vmatpush1.msra.mxu0 %v757
        %774 = vmatprep.subr.mxu0 0.0
        %775 = vmatpush1.msra.mxu0 %v758
        %776 = vmatprep.subr.mxu0 0.0
        %777 = vmatpush1.msra.mxu0 %v759
        %778 = vmatprep.subr.mxu0 0.0
        %779 = vmatpush1.msra.mxu0 0.0
        %780 = vmatprep.subr.mxu0 0.0
        %781 = vmatpush1.msra.mxu0 0.0
        %782 = vmatprep.subr.mxu0 0.0
        %783 = vmatpush1.msra.mxu0 0.0
        %784 = vmatprep.subr.mxu0 0.0
        %785 = vmatpush1.msra.mxu0 0.0
        %786 = vmatprep.subr.mxu0 0.0
        %787 = vmatpush1.msra.mxu0 0.0
        %788 = vmatprep.subr.mxu0 0.0
        %789 = vmatpush1.msra.mxu0 0.0
        %790 = vmatprep.subr.mxu0 0.0
        %791 = vmatpush1.msra.mxu0 0.0
        %792 = vmatprep.subr.mxu0 0.0
        %793 = vmatpush1.msra.mxu0 0.0
        %794 = vmatprep.subr.mxu0 0.0
        %795 = vmatpush1.msra.mxu0 0.0
        %796 = vmatprep.subr.mxu0 0.0
        %797 = vmatpush1.msra.mxu0 0.0
        %798 = vmatprep.subr.mxu0 0.0
        %799 = vmatpush1.msra.mxu0 0.0
        %800 = vmatprep.subr.mxu0 0.0
        %801 = vmatpush1.msra.mxu0 0.0
        %802 = vmatprep.subr.mxu0 0.0
        %803 = vmatpush1.msra.mxu0 0.0
        %804 = vmatprep.subr.mxu0 0.0
        %805 = vmatpush1.msra.mxu0 0.0
        %806 = vmatprep.subr.mxu0 0.0
        %807 = vmatpush1.msra.mxu0 0.0
        %808 = vmatprep.subr.mxu0 0.0
        %809 = vmatpush1.msra.mxu0 0.0
        %810 = vmatprep.subr.mxu0 0.0
        %811 = vmatpush1.msra.mxu0 0.0
        %812 = vmatprep.subr.mxu0 0.0
        %813 = vmatpush1.msra.mxu0 0.0
        %814 = vmatprep.subr.mxu0 0.0
        %815 = vmatpush1.msra.mxu0 0.0
        %816 = vmatprep.subr.mxu0 0.0
        %817 = vmatpush1.msra.mxu0 0.0
        %818 = vmatprep.subr.mxu0 0.0
        %819 = vmatpush1.msra.mxu0 0.0
        %820 = vmatprep.subr.mxu0 0.0
        %821 = vmatpush1.msra.mxu0 0.0
        %822 = vmatprep.subr.mxu0 0.0
        %823 = vmatpush1.msra.mxu0 0.0
        %824 = vmatprep.subr.mxu0 0.0
        %825 = vmatpush1.msra.mxu0 0.0
        %826 = vmatprep.subr.mxu0 0.0
        %827 = vmatpush1.msra.mxu0 0.0
        %828 = vmatprep.subr.mxu0 0.0
        %829 = vmatpush1.msra.mxu0 0.0
        %830 = vmatprep.subr.mxu0 0.0
        %831 = vmatpush1.msra.mxu0 0.0
        %832 = vmatprep.subr.mxu0 0.0
        %833 = vmatpush1.msra.mxu0 0.0
        %834 = vmatprep.mubr.f32.mxu0 0.0
        %835 = vmatmul.mubr.f32.gmra.mrb[0].mxu0 %v768
        %v836 = vpop.f32.mrb[0].mxu0
        %v837 = vadd.f32 %v765, %v836
        %v838 = vpop.f32.mrb[0].mxu0
        %839 = vdwg.mxu0
        %840 = vst [vmem:[%s368] sm:$0xff] %v837
        %s841 = sand.u32 %s225, 1
        %s842 = scalar_lea.sflag [#allocation4], %s841
        %s843 = sand.u32 %s225, 1
        %s844 = smul.addr %s843, 8
        %s845 = scalar_lea.vmem [#allocation3], %s844
        // Predicated region
        $region95: #{tpu_custom_call.1} parent=89 // pred_check
          %p846 = pneg %p235
        $region96: #{tpu_custom_call.1} parent=89 // pred_check_branch
          %848 = sbr.rel (%p846) target = $region98
        $region97: #{tpu_custom_call.1} parent=89 // pred_region
          %s850 = ssub.s32 128, 128
          %851 = vsyncadd %s842, %s850
          %s852 = smul.addr %s23, 128
          %s853 = scalar_lea.hbm %s9, %s852
          %s855 = sshll.u32 %s845, 4
          %s856 = int_to_ptr.vmem [resolvable:$true] %s855
          %858 = dma.vmem_to_hbm [thread:$0]  %s856, 128, %s853, %s842
        $region98: #{tpu_custom_call.1} parent=89 // pred_fallthru
          _
      $region90: #{tpu_custom_call.1} parent=5 // pred_fallthru
        _
      %p859 = scmp.le.s32.totalorder 2, %s18
      // Predicated region
      $region99: #{tpu_custom_call.1} parent=5 // pred_check
        %p860 = pneg %p859
      $region100: #{tpu_custom_call.1} parent=5 // pred_check_branch
        %862 = sbr.rel (%p860) target = $region102
      $region101: #{tpu_custom_call.1} parent=5 // pred_region
        %s863 = ssub.s32 %s18, 2
        // Predicated region
        $region103: #{tpu_custom_call.1} parent=101 // pred_check
          %p864 = pneg %p241
        $region104: #{tpu_custom_call.1} parent=101 // pred_check_branch
          %866 = sbr.rel (%p864) target = $region106
        $region105: #{tpu_custom_call.1} parent=101 // pred_region
          %s867 = sand.u32 %s226, 1
          %s868 = scalar_lea.sflag [#allocation4], %s867
          %s869 = sand.u32 %s226, 1
          %s870 = smul.addr %s869, 8
          %s871 = scalar_lea.vmem [#allocation3], %s870
          %872 = dma.done %s868, 128
        $region106: #{tpu_custom_call.1} parent=101 // pred_fallthru
          _
      $region102: #{tpu_custom_call.1} parent=5 // pred_fallthru
        _
    $region6: #{tpu_custom_call.1} parent=1 // loop_footer
      %s22 = sadd.s32 1, %s18
    $region7: #{tpu_custom_call.1} parent=1 // loop_footer_branch
      %17 = sbr.rel target = $region3
    $region8: #{tpu_custom_call.1} parent=1 // loop_exit
      _
    %873 = vsyncpa [#allocation4], 1
    %s874 = scalar_lea.sflag [#allocation4], 1
    %875 = vsyncpa %s874, 1

</llo_original>
